<compile_context>
chip_gen: v7x
topology: tpu7x:2x2x1
jax: 0.10.0
libtpu: 0.0.40
codegen_flags: <defaults>
</compile_context>

<pallas_src>
import functools

import jax
import jax.numpy as jnp
from jax.experimental import pallas as pl
from jax.experimental.pallas import tpu as pltpu

LANES = 128
_TM_MAX = 2048        # rows per (core, grid-step) block; f32 block = 1 MiB
_CHUNK_ROWS = 256     # rows per unrolled inner-loop iteration (keeps live vals in vregs)


def _cdiv(a, b):
    return -(-a // b)


def _sublane_align(*dtypes):
    # sublane packing: 4-byte -> 8, 2-byte -> 16, 1-byte -> 32
    return max(max(8, 32 // jnp.dtype(d).itemsize) for d in dtypes)


def _num_core_splits():
    """How many ways to split the leading grid axis (one per TensorCore)."""
    try:
        kind = (jax.devices()[0].device_kind or "").lower()
    except Exception:
        return 1
    # v4 / v5p (megacore) and v7x expose 2 TensorCores to one kernel;
    # v5e / v6e have a single TensorCore -> no split (full block size).
    return 2 if any(tag in kind for tag in ("v7", "v5p", "v4")) else 1


def _dimension_semantics(num_splits):
    if num_splits > 1:
        try:
            kind = (jax.devices()[0].device_kind or "").lower()
        except Exception:
            kind = ""
        # On v7x only CORE_PARALLEL actually shards a grid axis across the 2 TCs.
        if "v7" in kind and hasattr(pltpu, "CORE_PARALLEL"):
            return (pltpu.CORE_PARALLEL, pltpu.ARBITRARY)
    return ("parallel", "arbitrary")


def _elementwise_loss(x, t, *, smoothing, pos_weight):
    """Per-element smoothed BCE-with-logits in f32 (shared by kernel and tail)."""
    x = x.astype(jnp.float32)
    t = t.astype(jnp.float32) * (1.0 - smoothing) + 0.5 * smoothing
    one_m_t = 1.0 - t
    # stable softplus(-x); softplus(x) = softplus(-x) + x   (1 exp + 1 log on EUP)
    sp_neg = jnp.maximum(-x, 0.0) + jnp.log1p(jnp.exp(-jnp.abs(x)))
    if pos_weight is None or float(pos_weight) == 1.0:
        # pw*t + (1 - t) == 1  -> coefficient folded away at trace time
        return sp_neg + one_m_t * x
    pw = float(pos_weight)
    return (pw * t + one_m_t) * sp_neg + one_m_t * x


def _smoothed_bce_kernel(x_ref, t_ref, o_ref, acc_ref, *, smoothing, pos_weight, tm):
    i = pl.program_id(1)   # reduction axis within this core's range

    @pl.when(i == 0)
    def _():
        acc_ref[...] = jnp.zeros_like(acc_ref)

    def accumulate(x_chunk, t_chunk):
        elem = _elementwise_loss(x_chunk, t_chunk,
                                 smoothing=smoothing, pos_weight=pos_weight)
        r = elem.shape[0]
        # vreg-shaped accumulation: pure VPU adds, no per-step XLU reduce
        acc_ref[...] += elem.reshape(r // 8, 8, LANES).sum(axis=0)

    chunk = min(_CHUNK_ROWS, tm)
    n_full = tm // chunk
    rem = tm - n_full * chunk

    if n_full == 1 and rem == 0:
        accumulate(x_ref[...], t_ref[...])
    else:
        def body(j, carry):
            start = j * chunk
            if not isinstance(start, int):
                start = pl.multiple_of(start, chunk)
            accumulate(x_ref[pl.ds(start, chunk), :], t_ref[pl.ds(start, chunk), :])
            return carry
        jax.lax.fori_loop(0, n_full, body, 0, unroll=True)
        if rem:
            start = n_full * chunk
            accumulate(x_ref[pl.ds(start, rem), :], t_ref[pl.ds(start, rem), :])

    @pl.when(i == pl.num_programs(1) - 1)
    def _():
        o_ref[...] = jnp.sum(acc_ref[...], axis=0, keepdims=True)   # (1, 128) per core


def smoothed_bce_with_logits_loss(logits, targets, *, smoothing=0.05, pos_weight=None):
    """Pallas implementation of SmoothedBCEWithLogitsLoss.forward (mean reduction)."""
    assert logits.shape == targets.shape
    # TODO(synk): per-class tensor pos_weight (broadcast, as torch allows) is not
    # supported; only a Python scalar pos_weight.
    total_n = int(logits.size)
    smoothing = float(smoothing)

    x = logits.reshape(-1)
    t = targets.reshape(-1)
    # Hard 0/1 (bool / integer) labels are exact in bf16 -> halve their HBM bytes.
    if t.dtype == jnp.bool_ or jnp.issubdtype(t.dtype, jnp.integer):
        t = t.astype(jnp.bfloat16)

    num_splits = _num_core_splits()
    align = _sublane_align(x.dtype, t.dtype)
    rows_total = total_n // LANES

    def plan(ns):
        bpc = max(1, _cdiv(rows_total, _TM_MAX * ns))
        tm = (rows_total // (bpc * ns * align)) * align
        if tm == 0:
            return 0, 0
        tm = min(tm, _TM_MAX)
        return rows_total // (tm * ns), tm

    blocks_per_core, tm = plan(num_splits)
    if tm == 0 and num_splits > 1:
        num_splits = 1
        blocks_per_core, tm = plan(1)

    if tm == 0:
        # Input too small for even one aligned block -- a kernel buys nothing here.
        return (jnp.sum(_elementwise_loss(x, t, smoothing=smoothing,
                                          pos_weight=pos_weight))
                / jnp.float32(total_n))

    main_rows = blocks_per_core * tm * num_splits
    main_n = main_rows * LANES

    # No padding / copying: the kernel sees the aligned prefix in native dtype.
    x2 = x[:main_n].reshape(main_rows, LANES)
    t2 = t[:main_n].reshape(main_rows, LANES)

    kernel = functools.partial(
        _smoothed_bce_kernel, smoothing=smoothing, pos_weight=pos_weight, tm=tm)

    bytes_accessed = (x2.size * x2.dtype.itemsize
                      + t2.size * t2.dtype.itemsize
                      + num_splits * LANES * 4)

    partials = pl.pallas_call(
        kernel,
        out_shape=jax.ShapeDtypeStruct((num_splits, LANES), jnp.float32),
        grid_spec=pltpu.PrefetchScalarGridSpec(
            num_scalar_prefetch=0,
            grid=(num_splits, blocks_per_core),
            in_specs=[
                pl.BlockSpec((tm, LANES), lambda c, i: (c * blocks_per_core + i, 0)),
                pl.BlockSpec((tm, LANES), lambda c, i: (c * blocks_per_core + i, 0)),
            ],
            out_specs=pl.BlockSpec((1, LANES), lambda c, i: (c, 0)),
            scratch_shapes=[pltpu.VMEM((8, LANES), jnp.float32)],
        ),
        compiler_params=pltpu.CompilerParams(
            dimension_semantics=_dimension_semantics(num_splits),
        ),
        cost_estimate=pl.CostEstimate(
            flops=10 * main_n,
            transcendentals=2 * main_n,
            bytes_accessed=bytes_accessed,
        ),
    )(x2, t2)

    total = jnp.sum(partials)
    if main_n != total_n:
        # Ragged tail (< one grid super-step of elements): tiny fused jnp pass
        # instead of padding + masking the whole input (saves a full HBM copy).
        total = total + jnp.sum(_elementwise_loss(
            x[main_n:], t[main_n:], smoothing=smoothing, pos_weight=pos_weight))
    return total / jnp.float32(total_n)


def _reference_loss(logits, targets, smoothing=0.05, pos_weight=None):
    x = logits.astype(jnp.float32)
    t = targets.astype(jnp.float32) * (1.0 - smoothing) + 0.5 * smoothing
    sp = lambda z: jnp.maximum(z, 0.0) + jnp.log1p(jnp.exp(-jnp.abs(z)))
    pw = 1.0 if pos_weight is None else pos_weight
    return jnp.mean(pw * t * sp(-x) + (1.0 - t) * sp(x))


if __name__ == "__main__":
    key = jax.random.PRNGKey(0)
    k1, k2, k3, k4 = jax.random.split(key, 4)

    # segmentation-style logits/targets: N=2, C=4, H=W=16
    shape = (2, 4, 16, 16)
    logits = jax.random.normal(k1, shape, dtype=jnp.float32) * 2.0
    targets = (jax.random.uniform(k2, shape) > 0.5).astype(jnp.float32)

    loss = smoothed_bce_with_logits_loss(logits, targets, smoothing=0.05, pos_weight=None)
    loss = jax.block_until_ready(loss)
    ref = _reference_loss(logits, targets, smoothing=0.05, pos_weight=None)
    assert jnp.allclose(loss, ref, rtol=1e-5, atol=1e-5), (loss, ref)

    # bf16 logits + bool targets + ragged (non-multiple-of-128) element count:
    # exercises the native bf16 DMA path, the prefix/tail split (no padding),
    # and a scalar pos_weight != 1.
    shape2 = (2, 3, 17, 23)
    logits2 = (jax.random.normal(k3, shape2, dtype=jnp.float32) * 2.0).astype(jnp.bfloat16)
    targets2 = jax.random.uniform(k4, shape2) > 0.5          # bool -> bf16 in wrapper
    loss2 = smoothed_bce_with_logits_loss(logits2, targets2, smoothing=0.05, pos_weight=2.0)
    loss2 = jax.block_until_ready(loss2)
    ref2 = _reference_loss(logits2, targets2, smoothing=0.05, pos_weight=2.0)
    assert jnp.allclose(loss2, ref2, rtol=1e-4, atol=1e-5), (loss2, ref2)

    print("KERNEL_OK")
</pallas_src>

<mosaic_0001>
module attributes {stable_mosaic.version = 11 : i64} {
  func.func @_smoothed_bce_kernel(%arg0: i32, %arg1: i32, %arg2: memref<16x128xf32, #tpu.memory_space<vmem>>, %arg3: memref<16x128xf32, #tpu.memory_space<vmem>>, %arg4: memref<1x128xf32, #tpu.memory_space<vmem>>, %arg5: memref<8x128xf32, #tpu.memory_space<vmem>>) attributes {dimension_semantics = [#tpu.dimension_semantics<parallel>, #tpu.dimension_semantics<arbitrary>], iteration_bounds = array<i64: 1, 1>, scalar_prefetch = 0 : i64, scratch_operands = 1 : i64, tpu.core_type = #tpu.core_type<tc>, window_params = [{transform_indices = @transform_0, window_bounds = array<i64: 16, 128>}, {transform_indices = @transform_1, window_bounds = array<i64: 16, 128>}, {transform_indices = @transform_2, window_bounds = array<i64: 1, 128>}]} {
    %c0_i32 = arith.constant 0 : i32
    %0 = arith.cmpi eq, %arg1, %c0_i32 : i32
    %1 = arith.extui %0 : i1 to i32
    %c0_i32_0 = arith.constant 0 : i32
    %2 = arith.cmpi ne, %1, %c0_i32_0 : i32
    scf.if %2 {
      %cst_16 = arith.constant 0.000000e+00 : f32
      %31 = vector.broadcast %cst_16 : f32 to vector<8x128xf32>
      %c0_17 = arith.constant 0 : index
      %c0_18 = arith.constant 0 : index
      %32 = vector.load %arg5[%c0_17, %c0_18] : memref<8x128xf32, #tpu.memory_space<vmem>>, vector<8x128xf32>
      tpu.vector_store %arg5[%c0_17, %c0_18], %31 {strides = array<i32>} : memref<8x128xf32, #tpu.memory_space<vmem>>, vector<8x128xf32>,
    } else {
    }
    %c0 = arith.constant 0 : index
    %c0_1 = arith.constant 0 : index
    %3 = vector.load %arg2[%c0, %c0_1] : memref<16x128xf32, #tpu.memory_space<vmem>>, vector<16x128xf32>
    %c0_2 = arith.constant 0 : index
    %c0_3 = arith.constant 0 : index
    %4 = vector.load %arg3[%c0_2, %c0_3] : memref<16x128xf32, #tpu.memory_space<vmem>>, vector<16x128xf32>
    %cst = arith.constant 0.949999988 : f32
    %5 = vector.broadcast %cst : f32 to vector<16x128xf32>
    %6 = arith.mulf %4, %5 : vector<16x128xf32>
    %cst_4 = arith.constant 2.500000e-02 : f32
    %7 = vector.broadcast %cst_4 : f32 to vector<16x128xf32>
    %8 = arith.addf %6, %7 : vector<16x128xf32>
    %cst_5 = arith.constant 1.000000e+00 : f32
    %9 = vector.broadcast %cst_5 : f32 to vector<16x128xf32>
    %10 = arith.subf %9, %8 : vector<16x128xf32>
    %cst_6 = arith.constant 0.000000e+00 : f32
    %11 = vector.broadcast %cst_6 : f32 to vector<16x128xf32>
    %12 = arith.subf %11, %3 : vector<16x128xf32>
    %cst_7 = arith.constant 0.000000e+00 : f32
    %13 = vector.broadcast %cst_7 : f32 to vector<16x128xf32>
    %14 = arith.maximumf %12, %13 : vector<16x128xf32>
    %15 = math.absf %3 : vector<16x128xf32>
    %cst_8 = arith.constant 0.000000e+00 : f32
    %16 = vector.broadcast %cst_8 : f32 to vector<16x128xf32>
    %17 = arith.subf %16, %15 : vector<16x128xf32>
    %18 = math.exp %17 : vector<16x128xf32>
    %19 = math.log1p %18 : vector<16x128xf32>
    %20 = arith.addf %14, %19 : vector<16x128xf32>
    %21 = arith.mulf %10, %3 : vector<16x128xf32>
    %22 = arith.addf %20, %21 : vector<16x128xf32>
    %c0_9 = arith.constant 0 : index
    %c0_10 = arith.constant 0 : index
    %23 = vector.load %arg5[%c0_9, %c0_10] : memref<8x128xf32, #tpu.memory_space<vmem>>, vector<8x128xf32>
    %24 = vector.shape_cast %22 : vector<16x128xf32> to vector<2x8x128xf32>
    %cst_11 = arith.constant dense<0.000000e+00> : vector<8x128xf32>
    %25 = vector.multi_reduction <add>, %24, %cst_11 [0] : vector<2x8x128xf32> to vector<8x128xf32>
    %26 = arith.addf %23, %25 : vector<8x128xf32>
    %c0_12 = arith.constant 0 : index
    %c0_13 = arith.constant 0 : index
    %27 = vector.load %arg5[%c0_12, %c0_13] : memref<8x128xf32, #tpu.memory_space<vmem>>, vector<8x128xf32>
    tpu.vector_store %arg5[%c0_12, %c0_13], %26 {strides = array<i32>} : memref<8x128xf32, #tpu.memory_space<vmem>>, vector<8x128xf32>,
    %c0_i32_14 = arith.constant 0 : i32
    %28 = arith.cmpi eq, %arg1, %c0_i32_14 : i32
    %29 = arith.extui %28 : i1 to i32
    %c0_i32_15 = arith.constant 0 : i32
    %30 = arith.cmpi ne, %29, %c0_i32_15 : i32
    scf.if %30 {
      %c0_16 = arith.constant 0 : index
      %c0_17 = arith.constant 0 : index
      %31 = vector.load %arg5[%c0_16, %c0_17] : memref<8x128xf32, #tpu.memory_space<vmem>>, vector<8x128xf32>
      %cst_18 = arith.constant dense<0.000000e+00> : vector<128xf32>
      %32 = vector.multi_reduction <add>, %31, %cst_18 [0] : vector<8x128xf32> to vector<128xf32>
      %33 = vector.shape_cast %32 : vector<128xf32> to vector<1x128xf32>
      %c0_19 = arith.constant 0 : index
      %c0_20 = arith.constant 0 : index
      %34 = vector.load %arg4[%c0_19, %c0_20] : memref<1x128xf32, #tpu.memory_space<vmem>>, vector<1x128xf32>
      tpu.vector_store %arg4[%c0_19, %c0_20], %33 {strides = array<i32>} : memref<1x128xf32, #tpu.memory_space<vmem>>, vector<1x128xf32>,
    } else {
    }
    return
  }
  func.func @transform_0(%arg0: i32, %arg1: i32) -> (i32, i32) {
    %c1_i32 = arith.constant 1 : i32
    %0 = arith.muli %arg0, %c1_i32 : i32
    %1 = arith.addi %0, %arg1 : i32
    %c0_i32 = arith.constant 0 : i32
    %c0_i32_0 = arith.constant 0 : i32
    return %1, %c0_i32 : i32, i32
  }
  func.func @transform_1(%arg0: i32, %arg1: i32) -> (i32, i32) {
    %c1_i32 = arith.constant 1 : i32
    %0 = arith.muli %arg0, %c1_i32 : i32
    %1 = arith.addi %0, %arg1 : i32
    %c0_i32 = arith.constant 0 : i32
    %c0_i32_0 = arith.constant 0 : i32
    return %1, %c0_i32 : i32, i32
  }
  func.func @transform_2(%arg0: i32, %arg1: i32) -> (i32, i32) {
    %c0_i32 = arith.constant 0 : i32
    %c0_i32_0 = arith.constant 0 : i32
    return %arg0, %c0_i32 : i32, i32
  }
}

</mosaic_0001>

<llo_original>
// kernel: tpu_custom_call.1
$region0: #{tpu_custom_call.1}
  #allocation0 [shape = 'u32[]', space=smem, size = 0x4, offset = 0x4, fixed_abs, tag = 'smem constant byte address 0x4 - core index']
  #allocation1 [shape = 'u32[144,128]{1,0:T(1,128)}', space=vmem, size = 0x12000, scoped, tag = 'internal scratch']
  #allocation2 [shape = 'f32[8,128]{1,0:T(8,128)}', space=vmem, size = 0x1000, scoped, tag = 'scratch operand']
  %s0 = inlined_call_operand.hbm [shape: f32[16,128], index: 0, kind: input, shape index: {}]
  %s1 = inlined_call_operand.hbm [shape: f32[16,128], index: 1, kind: input, shape index: {}]
  %s2 = inlined_call_operand.hbm [shape: f32[1,128], index: 2, kind: output, shape index: {}]
  %s3 = sld [smem:[#allocation0]]
  $region34: #{tpu_custom_call.1} parent=0
    _
  %s5 = ssub.s32 1, %s3
  %s6 = scalar_select 0, %s5, %s3
  $region1: #{tpu_custom_call.1} parent=0
    #allocation3 [shape = 'u8[8192]{0}', space=vmem, size = 0x2000, scoped, tag = 'input window, operand 0, single buffered']
    #allocation4 [shape = 's32[1]{0}', space=sflag, size = 0x4, scoped, tag = 'scoped memory for tpu_custom_call.1']
    #allocation5 [shape = 's32[1]{0}', space=sflag, size = 0x4, scoped, tag = 'scoped memory for tpu_custom_call.1']
    #allocation6 [shape = 'u8[8192]{0}', space=vmem, size = 0x2000, scoped, tag = 'input window, operand 1, single buffered']
    #allocation7 [shape = 's32[1]{0}', space=sflag, size = 0x4, scoped, tag = 'scoped memory for tpu_custom_call.1']
    #allocation8 [shape = 'u8[512]{0}', space=vmem, size = 0x400, scoped, tag = 'output window, operand 0, single buffered']
    %7 = vsyncpa [#allocation4], 0
    %8 = vsyncpa [#allocation7], 0
    %9 = vsyncpa [#allocation5], 0
    // Predicated region
    $region2: #{tpu_custom_call.1} parent=1 // pred_check
      _
    $region3: #{tpu_custom_call.1} parent=1 // pred_check_branch
      %11 = sbr.rel (0) target = $region5
    $region4: #{tpu_custom_call.1} parent=1 // pred_region
      %s12 = sadd.s32 0, 0
      %s13 = smul.u32 2, %s12
      %s15 = ssub.s32 256, 256
      %16 = vsyncadd [#allocation4], %s15
      %s17 = smul.addr %s13, 128
      %s18 = scalar_lea.hbm %s0, %s17
      %s19 = sshll.u32 [#allocation3], 4
      %s20 = int_to_ptr.vmem [resolvable:$true] %s19
      %25 = dma.hbm_to_vmem [thread:$0]  %s18, 256, %s20, [#allocation4], 128, 128, 8
    $region5: #{tpu_custom_call.1} parent=1 // pred_fallthru
      _
    // Predicated region
    $region6: #{tpu_custom_call.1} parent=1 // pred_check
      _
    $region7: #{tpu_custom_call.1} parent=1 // pred_check_branch
      %27 = sbr.rel (0) target = $region9
    $region8: #{tpu_custom_call.1} parent=1 // pred_region
      %s28 = sadd.s32 0, 0
      %s29 = smul.u32 2, %s28
      %s31 = ssub.s32 256, 256
      %32 = vsyncadd [#allocation7], %s31
      %s33 = smul.addr %s29, 128
      %s34 = scalar_lea.hbm %s1, %s33
      %s35 = sshll.u32 [#allocation6], 4
      %s36 = int_to_ptr.vmem [resolvable:$true] %s35
      %41 = dma.hbm_to_vmem [thread:$0]  %s34, 256, %s36, [#allocation7], 128, 128, 8
    $region9: #{tpu_custom_call.1} parent=1 // pred_fallthru
      _
    // Predicated region
    $region10: #{tpu_custom_call.1} parent=1 // pred_check
      _
    $region11: #{tpu_custom_call.1} parent=1 // pred_check_branch
      %43 = sbr.rel (0) target = $region13
    $region12: #{tpu_custom_call.1} parent=1 // pred_region
      %44 = dma.done [#allocation4], 256
    $region13: #{tpu_custom_call.1} parent=1 // pred_fallthru
      _
    // Predicated region
    $region14: #{tpu_custom_call.1} parent=1 // pred_check
      _
    $region15: #{tpu_custom_call.1} parent=1 // pred_check_branch
      %46 = sbr.rel (0) target = $region17
    $region16: #{tpu_custom_call.1} parent=1 // pred_region
      %47 = dma.done [#allocation7], 256
    $region17: #{tpu_custom_call.1} parent=1 // pred_fallthru
      _
    %s48 = sadd.s32 0, 0
    %s49 = smul.u32 2, %s48
    %s50 = sadd.s32 0, 0
    %s51 = smul.u32 2, %s50
    %p52 = scmp.eq.s32.totalorder 0, 0
    // Predicated region
    $region18: #{tpu_custom_call.1} parent=1 // pred_check
      %p53 = pneg %p52
    $region19: #{tpu_custom_call.1} parent=1 // pred_check_branch
      %55 = sbr.rel (%p53) target = $region21
    $region20: #{tpu_custom_call.1} parent=1 // pred_region
      %56 = vst [vmem:[#allocation2] sm:$0xff] 0.0
    $region21: #{tpu_custom_call.1} parent=1 // pred_fallthru
      _
    %v57 = vld [vmem:[#allocation3] sm:$0xff]
    %v58 = vld [vmem:[#allocation3 + $0x8] sm:$0xff]
    %v59 = vld [vmem:[#allocation6] sm:$0xff]
    %v60 = vld [vmem:[#allocation6 + $0x8] sm:$0xff]
    %v61 = vmul.f32 %v59, 0.95
    %v62 = vmul.f32 %v60, 0.95
    %v63 = vadd.f32 %v61, 0.025
    %v64 = vadd.f32 %v62, 0.025
    %v65 = vsub.f32 1.0, %v63
    %v66 = vsub.f32 1.0, %v64
    %v67 = vsub.f32 0.0, %v57
    %v68 = vsub.f32 0.0, %v58
    %v69 = vmax.f32 %v67, 0.0
    %v70 = vmax.f32 %v68, 0.0
    %v71 = vand.u32 2147483647, %v57
    %v72 = vand.u32 2147483647, %v58
    %v73 = vsub.f32 0.0, %v71
    %v74 = vsub.f32 0.0, %v72
    %v75 = vmul.f32 %v73, 1.442695
    %v76 = vpow.pop %v75
    %v77 = vmul.f32 %v74, 1.442695
    %v78 = vpow.pop %v77
    %v79 = vadd.f32 %v76, 1.0
    %v80 = vlog2.pop %v79
    %v81 = vmul.f32 %v80, 0.6931472
    %v82 = vmul.f32 -0.5, %v76
    %v83 = vadd.f32 %v82, 1.0
    %v84 = vmul.f32 %v83, %v76
    %v85 = vand.u32 2147483647, %v76
    %vm86 = vcmp.lt.f32.partialorder %v85, 0.0004427343
    %v87 = vsel %vm86, %v84, %v81
    %v88 = vadd.f32 %v78, 1.0
    %v89 = vlog2.pop %v88
    %v90 = vmul.f32 %v89, 0.6931472
    %v91 = vmul.f32 -0.5, %v78
    %v92 = vadd.f32 %v91, 1.0
    %v93 = vmul.f32 %v92, %v78
    %v94 = vand.u32 2147483647, %v78
    %vm95 = vcmp.lt.f32.partialorder %v94, 0.0004427343
    %v96 = vsel %vm95, %v93, %v90
    %v97 = vadd.f32 %v69, %v87
    %v98 = vadd.f32 %v70, %v96
    %v99 = vmul.f32 %v65, %v57
    %v100 = vmul.f32 %v66, %v58
    %v101 = vadd.f32 %v97, %v99
    %v102 = vadd.f32 %v98, %v100
    %v103 = vld [vmem:[#allocation2] sm:$0xff]
    %v104 = vadd.f32 %v101, %v102
    %v105 = vadd.f32 %v103, %v104
    %106 = vst [vmem:[#allocation2] sm:$0xff] %v105
    // Predicated region
    $region22: #{tpu_custom_call.1} parent=1 // pred_check
      %p107 = pneg %p52
    $region23: #{tpu_custom_call.1} parent=1 // pred_check_branch
      %109 = sbr.rel (%p107) target = $region25
    $region24: #{tpu_custom_call.1} parent=1 // pred_region
      %v110 = vld [vmem:[#allocation2] sm:$0xff]
      %v111 = vrot.slane %v110, 4
      %v112 = vadd.f32 %v110, %v111
      %v113 = vrot.slane %v112, 2
      %v114 = vadd.f32 %v112, %v113
      %v115 = vrot.slane %v114, 1
      %v116 = vadd.f32 %v114, %v115
      %117 = vst [vmem:[#allocation8] sm:$0x1] %v116
    $region25: #{tpu_custom_call.1} parent=1 // pred_fallthru
      _
    // Predicated region
    $region26: #{tpu_custom_call.1} parent=1 // pred_check
      _
    $region27: #{tpu_custom_call.1} parent=1 // pred_check_branch
      %119 = sbr.rel (0) target = $region29
    $region28: #{tpu_custom_call.1} parent=1 // pred_region
      %s121 = ssub.s32 16, 16
      %122 = vsyncadd [#allocation5], %s121
      %s124 = sshll.u32 [#allocation8], 4
      %s125 = int_to_ptr.vmem [resolvable:$true] %s124
      %127 = dma.vmem_to_hbm [thread:$0]  %s125, 16, %s2, [#allocation5]
    $region29: #{tpu_custom_call.1} parent=1 // pred_fallthru
      _
    // Predicated region
    $region30: #{tpu_custom_call.1} parent=1 // pred_check
      _
    $region31: #{tpu_custom_call.1} parent=1 // pred_check_branch
      %129 = sbr.rel (0) target = $region33
    $region32: #{tpu_custom_call.1} parent=1 // pred_region
      %130 = dma.done [#allocation5], 16
    $region33: #{tpu_custom_call.1} parent=1 // pred_fallthru
      _
    %131 = vsyncpa [#allocation4], 1
    %132 = vsyncpa [#allocation7], 1
    %133 = vsyncpa [#allocation5], 1

</llo_original>
